<compile_context>
chip_gen: v5e
topology: v5e:2x2
jax: 0.10.0
libtpu: 0.0.40
codegen_flags: <defaults>
</compile_context>

<pallas_src>
import jax
import jax.numpy as jnp
from jax.experimental import pallas as pl
from jax.experimental.pallas import tpu as pltpu

IN_FEATURES = 64
POLICY_DIM = 9
VALUE_DIM = 1
PAD_OUT = 16            # policy (9) + value (1) + 6 zero-padding columns
VALUE_COL = POLICY_DIM  # column index 9 holds the value head


def _prediction_kernel(x_ref, w_ref, b_ref, out_ref):
    # x_ref: [TILE_B, 64], w_ref: [64, 16], b_ref: [1, 16] (f32),
    # out_ref: [TILE_B, 16].  Single MXU pass + bias add; no transcendentals.
    acc = jnp.dot(x_ref[...], w_ref[...], preferred_element_type=jnp.float32)
    out_ref[...] = (acc + b_ref[...]).astype(out_ref.dtype)


def pack_prediction_params(w_policy, b_policy, w_value, b_value):
    """Pack both heads into one [64, 16] weight slab + [1, 16] f32 bias slab.

    Call ONCE at parameter-init time (not per forward call).
    Columns 0..8 = policy, column 9 = value, columns 10..15 = zero padding.
    """
    pad = PAD_OUT - POLICY_DIM - VALUE_DIM
    w = jnp.concatenate(
        [w_policy.astype(jnp.float32), w_value.astype(jnp.float32)], axis=1)
    w_fused = jnp.pad(w, ((0, 0), (0, pad)))
    b = jnp.concatenate(
        [b_policy.reshape(1, POLICY_DIM).astype(jnp.float32),
         b_value.reshape(1, VALUE_DIM).astype(jnp.float32)], axis=1)
    b_fused = jnp.pad(b, ((0, 0), (0, pad)))
    return w_fused, b_fused


def prediction_network(x, w_fused, b_fused, *, tile_b=4096, core_parallel=False):
    """x: [B, 64].  w_fused: [64, 16], b_fused: [1, 16] from
    pack_prediction_params().  Returns (policy [B, 9], value [B, 1])."""
    B = x.shape[0]
    itemsize = jnp.dtype(x.dtype).itemsize

    # Weights follow x's dtype so bf16 activations don't force an f32 HBM
    # pass; the cast is a tiny (4 KiB) one-off.  Bias stays f32 (added to the
    # f32 MXU accumulator).
    if w_fused.dtype != x.dtype:
        w_fused = w_fused.astype(x.dtype)

    # Batch tiling: multiple of 8 sublanes; big enough that the grid loop is
    # bandwidth-bound rather than per-step-overhead-bound.  No padding of x:
    # Pallas masks the ragged last block.
    tile = max(8, min(int(tile_b), pl.cdiv(B, 8) * 8))
    grid = (pl.cdiv(B, tile),)

    cost = pl.CostEstimate(
        flops=2 * B * IN_FEATURES * PAD_OUT,
        transcendentals=0,
        bytes_accessed=(B * IN_FEATURES * itemsize          # read x
                        + B * PAD_OUT * itemsize            # write out slab
                        + IN_FEATURES * PAD_OUT * itemsize  # weight slab
                        + PAD_OUT * 4),                     # bias slab
    )

    # "parallel" on single-TC chips (v5e/v6e); CORE_PARALLEL splits the batch
    # axis across the two TensorCores on v7x.
    semantics = (pltpu.CORE_PARALLEL,) if core_parallel else ("parallel",)

    out = pl.pallas_call(
        _prediction_kernel,
        out_shape=jax.ShapeDtypeStruct((B, PAD_OUT), x.dtype),
        grid_spec=pltpu.PrefetchScalarGridSpec(
            num_scalar_prefetch=0,
            grid=grid,
            in_specs=[
                pl.BlockSpec((tile, IN_FEATURES), lambda i: (i, 0)),
                pl.BlockSpec((IN_FEATURES, PAD_OUT), lambda i: (0, 0)),
                pl.BlockSpec((1, PAD_OUT), lambda i: (0, 0)),
            ],
            out_specs=pl.BlockSpec((tile, PAD_OUT), lambda i: (i, 0)),
        ),
        compiler_params=pltpu.CompilerParams(dimension_semantics=semantics),
        cost_estimate=cost,
    )(x, w_fused, b_fused)

    policy = out[:, :POLICY_DIM]
    # tanh applied only to the B value scalars, in the wrapper (EUP work in
    # the kernel was 16x redundant over the padded slab).
    value = jnp.tanh(out[:, VALUE_COL:VALUE_COL + VALUE_DIM])
    return policy, value


def init_params(key):
    """Deterministic parameter init mirroring nn.Linear shapes.

    PyTorch stores Linear weights as [out, in]; here they are kept as
    [in, out] (pre-transposed) so the kernel does x @ W directly.
    """
    k1, k2, k3, k4 = jax.random.split(key, 4)
    bound = 1.0 / (IN_FEATURES ** 0.5)
    w_policy = jax.random.uniform(k1, (IN_FEATURES, POLICY_DIM),
                                  minval=-bound, maxval=bound,
                                  dtype=jnp.float32)
    b_policy = jax.random.uniform(k2, (1, POLICY_DIM),
                                  minval=-bound, maxval=bound,
                                  dtype=jnp.float32)
    w_value = jax.random.uniform(k3, (IN_FEATURES, VALUE_DIM),
                                 minval=-bound, maxval=bound,
                                 dtype=jnp.float32)
    b_value = jax.random.uniform(k4, (1, VALUE_DIM),
                                 minval=-bound, maxval=bound,
                                 dtype=jnp.float32)
    return w_policy, b_policy, w_value, b_value


if __name__ == "__main__":
    key = jax.random.PRNGKey(0)
    k_x, k_params = jax.random.split(key)

    B = 2
    x = jax.random.normal(k_x, (B, IN_FEATURES), dtype=jnp.float32)
    w_policy, b_policy, w_value, b_value = init_params(k_params)

    # Pack the fused weight/bias slabs ONCE (init-time), not per call.
    w_fused, b_fused = pack_prediction_params(w_policy, b_policy,
                                              w_value, b_value)

    policy, value = prediction_network(x, w_fused, b_fused)
    policy, value = jax.block_until_ready((policy, value))

    # Reference check against plain JAX.
    policy_ref = x @ w_policy + b_policy
    value_ref = jnp.tanh(x @ w_value + b_value)
    assert policy.shape == (B, POLICY_DIM)
    assert value.shape == (B, VALUE_DIM)
    assert jnp.allclose(policy, policy_ref, atol=1e-5, rtol=1e-5)
    assert jnp.allclose(value, value_ref, atol=1e-5, rtol=1e-5)

    print("KERNEL_OK")
</pallas_src>

<mosaic_0001>
module attributes {stable_mosaic.version = 11 : i64} {
  func.func @_prediction_kernel(%arg0: i32, %arg1: memref<8x64xf32, #tpu.memory_space<vmem>>, %arg2: memref<64x16xf32, #tpu.memory_space<vmem>>, %arg3: memref<1x16xf32, #tpu.memory_space<vmem>>, %arg4: memref<8x16xf32, #tpu.memory_space<vmem>>) attributes {dimension_semantics = [#tpu.dimension_semantics<parallel>], iteration_bounds = array<i64: 1>, scalar_prefetch = 0 : i64, scratch_operands = 0 : i64, tpu.core_type = #tpu.core_type<tc>, window_params = [{transform_indices = @transform_0, window_bounds = array<i64: 8, 64>}, {pipeline_mode = #tpu.pipeline_mode<synchronous>, transform_indices = @transform_1, window_bounds = array<i64: 64, 16>}, {pipeline_mode = #tpu.pipeline_mode<synchronous>, transform_indices = @transform_2, window_bounds = array<i64: 1, 16>}, {transform_indices = @transform_3, window_bounds = array<i64: 8, 16>}]} {
    %c0 = arith.constant 0 : index
    %c0_0 = arith.constant 0 : index
    %0 = vector.load %arg1[%c0, %c0_0] : memref<8x64xf32, #tpu.memory_space<vmem>>, vector<8x64xf32>
    %c0_1 = arith.constant 0 : index
    %c0_2 = arith.constant 0 : index
    %1 = vector.load %arg2[%c0_1, %c0_2] : memref<64x16xf32, #tpu.memory_space<vmem>>, vector<64x16xf32>
    %cst = arith.constant dense<0.000000e+00> : vector<8x16xf32>
    %2 = tpu.matmul %0, %1, %cst {dimension_numbers = #tpu.dot_dimension_numbers<[1], [0], [0], [1], [0, 0, 1, 1], [], []>} : vector<8x64xf32>, vector<64x16xf32>, vector<8x16xf32> -> vector<8x16xf32>
    %c0_3 = arith.constant 0 : index
    %c0_4 = arith.constant 0 : index
    %3 = vector.load %arg3[%c0_3, %c0_4] : memref<1x16xf32, #tpu.memory_space<vmem>>, vector<1x16xf32>
    %4 = vector.broadcast %3 : vector<1x16xf32> to vector<8x16xf32>
    %5 = arith.addf %2, %4 : vector<8x16xf32>
    %c0_5 = arith.constant 0 : index
    %c0_6 = arith.constant 0 : index
    %6 = vector.load %arg4[%c0_5, %c0_6] : memref<8x16xf32, #tpu.memory_space<vmem>>, vector<8x16xf32>
    tpu.vector_store %arg4[%c0_5, %c0_6], %5 {strides = array<i32>} : memref<8x16xf32, #tpu.memory_space<vmem>>, vector<8x16xf32>,
    return
  }
  func.func @transform_0(%arg0: i32) -> (i32, i32) {
    %c0_i32 = arith.constant 0 : i32
    %c0_i32_0 = arith.constant 0 : i32
    return %arg0, %c0_i32 : i32, i32
  }
  func.func @transform_1(%arg0: i32) -> (i32, i32) {
    %c0_i32 = arith.constant 0 : i32
    %c0_i32_0 = arith.constant 0 : i32
    %c0_i32_1 = arith.constant 0 : i32
    return %c0_i32, %c0_i32_0 : i32, i32
  }
  func.func @transform_2(%arg0: i32) -> (i32, i32) {
    %c0_i32 = arith.constant 0 : i32
    %c0_i32_0 = arith.constant 0 : i32
    %c0_i32_1 = arith.constant 0 : i32
    return %c0_i32, %c0_i32_0 : i32, i32
  }
  func.func @transform_3(%arg0: i32) -> (i32, i32) {
    %c0_i32 = arith.constant 0 : i32
    %c0_i32_0 = arith.constant 0 : i32
    return %arg0, %c0_i32 : i32, i32
  }
}

</mosaic_0001>

<llo_original>
// kernel: tpu_custom_call.1
$region0: #{tpu_custom_call.1}
  #allocation0 [shape = 'u32[]', space=smem, size = 0x4, offset = 0x4, fixed_abs, tag = 'smem constant byte address 0x4 - core index']
  #allocation1 [shape = 'u32[72,128]{1,0:T(1,128)}', space=vmem, size = 0x9000, scoped, tag = 'internal scratch']
  %s0 = inlined_call_operand.vmem [shape: f32[2,64], index: 0, kind: input, shape index: {}]
  %s1 = inlined_call_operand.vmem [shape: f32[64,16], index: 1, kind: input, shape index: {}]
  %s2 = inlined_call_operand.vmem [shape: f32[1,16], index: 2, kind: input, shape index: {}]
  %s3 = inlined_call_operand.hbm [shape: f32[2,16], index: 3, kind: output, shape index: {}]
  %s4 = sld [smem:[#allocation0]]
  $region22: #{tpu_custom_call.1} parent=0
    _
  %s6 = ssub.s32 1, %s4
  %s7 = scalar_select 0, %s6, %s4
  $region1: #{tpu_custom_call.1} parent=0
    #allocation2 [shape = 'u8[4096]{0}', space=vmem, size = 0x1000, scoped, tag = 'output window, operand 0, single buffered']
    #allocation3 [shape = 's32[1]{0}', space=sflag, size = 0x4, scoped, tag = 'scoped memory for tpu_custom_call.1']
    %8 = vsyncpa [#allocation3], 0
    // Predicated region
    $region2: #{tpu_custom_call.1} parent=1 // pred_check
      _
    $region3: #{tpu_custom_call.1} parent=1 // pred_check_branch
      %10 = sbr.rel (0) target = $region5
    $region4: #{tpu_custom_call.1} parent=1 // pred_region
      _
    $region5: #{tpu_custom_call.1} parent=1 // pred_fallthru
      _
    // Predicated region
    $region6: #{tpu_custom_call.1} parent=1 // pred_check
      _
    $region7: #{tpu_custom_call.1} parent=1 // pred_check_branch
      %12 = sbr.rel (0) target = $region9
    $region8: #{tpu_custom_call.1} parent=1 // pred_region
      _
    $region9: #{tpu_custom_call.1} parent=1 // pred_fallthru
      _
    // Predicated region
    $region10: #{tpu_custom_call.1} parent=1 // pred_check
      _
    $region11: #{tpu_custom_call.1} parent=1 // pred_check_branch
      %14 = sbr.rel (0) target = $region13
    $region12: #{tpu_custom_call.1} parent=1 // pred_region
      _
    $region13: #{tpu_custom_call.1} parent=1 // pred_fallthru
      _
    %v15 = vld [vmem:[%s0] sm:$0xff]
    %v16 = vld [vmem:[%s1] sm:$0xff]
    %v17 = vld [vmem:[%s1 + $0x8] sm:$0xff]
    %v18 = vld [vmem:[%s1 + $0x10] sm:$0xff]
    %v19 = vld [vmem:[%s1 + $0x18] sm:$0xff]
    %v20 = vld [vmem:[%s1 + $0x20] sm:$0xff]
    %v21 = vld [vmem:[%s1 + $0x28] sm:$0xff]
    %v22 = vld [vmem:[%s1 + $0x30] sm:$0xff]
    %v23 = vld [vmem:[%s1 + $0x38] sm:$0xff]
    %v24 = vld [vmem:[%s2] sm:$0x1]
    %v26 = vperm.slane %v24, 0
    %vm28 = vcmask 523264
    %v30 = vsel %vm28, %v15, 0
    %32 = vmatpush.msra.mxu0 0.0
    %33 = vmatpush.msra.mxu0 0.0
    %34 = vmatpush.msra.mxu0 0.0
    %35 = vmatpush.msra.mxu0 0.0
    %36 = vmatpush.msra.mxu0 0.0
    %37 = vmatpush.msra.mxu0 0.0
    %38 = vmatpush.msra.mxu0 0.0
    %39 = vmatpush.msra.mxu0 0.0
    %40 = vmatpush.msra.mxu0 %v23
    %41 = vmatpush.msra.mxu0 %v22
    %42 = vmatpush.msra.mxu0 %v21
    %43 = vmatpush.msra.mxu0 %v20
    %44 = vmatpush.msra.mxu0 %v19
    %45 = vmatpush.msra.mxu0 %v18
    %46 = vmatpush.msra.mxu0 %v17
    %47 = vmatpush.msra.mxu0 %v16
    %48 = vmatmul.f32.gmra.mxu0 %v30
    %v49 = vpop.f32.mrf.mxu0
    %v50 = vadd.f32 %v26, %v49
    %51 = vdwg.mxu0
    %vm52 = vcmask 130048
    %53 = vst.msk [vmem:[#allocation2] sm:$0xff] %vm52, %v50
    // Predicated region
    $region14: #{tpu_custom_call.1} parent=1 // pred_check
      _
    $region15: #{tpu_custom_call.1} parent=1 // pred_check_branch
      %55 = sbr.rel (0) target = $region17
    $region16: #{tpu_custom_call.1} parent=1 // pred_region
      %57 = vsyncadd [#allocation3], 96
      %s58 = sshll.u32 [#allocation2], 4
      %s59 = int_to_ptr.vmem [resolvable:$true] %s58
      %s60 = sshll.u32 %s3, 4
      %s61 = int_to_ptr.hbm [resolvable:$true] %s60
      %66 = dma.vmem_to_hbm [thread:$0]  %s59, 32, %s61, [#allocation3], 32, 32, 2
    $region17: #{tpu_custom_call.1} parent=1 // pred_fallthru
      _
    // Predicated region
    $region18: #{tpu_custom_call.1} parent=1 // pred_check
      _
    $region19: #{tpu_custom_call.1} parent=1 // pred_check_branch
      %68 = sbr.rel (0) target = $region21
    $region20: #{tpu_custom_call.1} parent=1 // pred_region
      %70 = dma.done [#allocation3], 128
    $region21: #{tpu_custom_call.1} parent=1 // pred_fallthru
      _
    %71 = vsyncpa [#allocation3], 1

</llo_original>
